<compile_context>
chip_gen: v7x
topology: tpu7x:2x2x1
jax: 0.10.0
libtpu: 0.0.40
codegen_flags: <defaults>
</compile_context>

<pallas_src>
import functools

import jax
import jax.numpy as jnp
from jax.experimental import pallas as pl
from jax.experimental.pallas import tpu as pltpu

EPS = 1e-5  # PyTorch BatchNorm2d default eps


# ---------------------------------------------------------------------------
# Kernel 1: FullyConnected hot path, tiled over (B, L0 rows)
#   |z0_i - z1_j| / z0_i*z1_j broadcast + fused 1x1 conv (single matmul) +
#   ReLU, plus per-tile BN1 partial statistics.
# ---------------------------------------------------------------------------
def _hidden_kernel(z0_ref, z1_ref, w_ref, hid_ref, s1_ref, s2_ref):
    z0 = z0_ref[0]                                   # (TL0, D)
    z1 = z1_ref[0]                                   # (L1, D)
    tl0, d = z0.shape
    l1 = z1.shape[0]
    h = w_ref.shape[1]
    dif = jnp.abs(z0[:, None, :] - z1[None, :, :])   # (TL0, L1, D)
    mul = z0[:, None, :] * z1[None, :, :]            # (TL0, L1, D)
    # Fused [dif ; mul] channel dim -> one MXU matmul with K = 2D (bias == 0).
    cat = jnp.concatenate([dif, mul], axis=-1).reshape(tl0 * l1, 2 * d)
    c = jnp.dot(cat, w_ref[...], preferred_element_type=jnp.float32)
    c = jnp.maximum(c, 0.0)                          # ReLU
    hid_ref[0] = c.reshape(tl0, l1, h)
    # Per-tile, per-channel BN1 partials -> no extra HBM pass over `hidden`.
    s1_ref[0, 0] = jnp.sum(c, axis=0, keepdims=True)
    s2_ref[0, 0] = jnp.sum(c * c, axis=0, keepdims=True)


# ---------------------------------------------------------------------------
# Kernel 2: fused BN1-normalize + 7x7 "same" conv (H -> 1), row-tiled w/ halo
#   w_ref holds w2 * inv_std1 (per channel); mean_ref holds the per-channel
#   mean.  Out-of-image rows/cols are treated as `mean`, which is exactly
#   zero-padding of the *normalized* map.  hidden stays in HBM; the
#   (TL0 + 2*pad)-row window (body + halo) is fetched with manual DMA.
# ---------------------------------------------------------------------------
def _conv_bn1_kernel(k, mean_ref, w_ref, hid_hbm, out_ref, scratch, sem):
    pad = k // 2
    b = pl.program_id(0)
    i = pl.program_id(1)
    nb = pl.num_programs(1)
    tl0 = out_ref.shape[1]
    rows, l1, h = scratch.shape                      # rows == TL0 + 2*pad
    r0 = i * tl0
    mean = mean_ref[0]                               # (H,)

    body_cp = pltpu.make_async_copy(hid_hbm.at[b, pl.ds(r0, tl0)],
                                    scratch.at[pl.ds(pad, tl0)], sem.at[0])
    top_cp = pltpu.make_async_copy(hid_hbm.at[b, pl.ds(r0 - pad, pad)],
                                   scratch.at[pl.ds(0, pad)], sem.at[1])
    bot_cp = pltpu.make_async_copy(hid_hbm.at[b, pl.ds(r0 + tl0, pad)],
                                   scratch.at[pl.ds(rows - pad, pad)],
                                   sem.at[2])
    body_cp.start()

    @pl.when(i > 0)
    def _():
        top_cp.start()

    @pl.when(i < nb - 1)
    def _():
        bot_cp.start()

    # Rows outside the image: fill with the BN1 mean so (x - mean) == 0 there
    # (disjoint from the DMA target regions at runtime).
    fill = jnp.broadcast_to(mean[None, None, :], (pad, l1, h))

    @pl.when(i == 0)
    def _():
        scratch[0:pad] = fill

    @pl.when(i == nb - 1)
    def _():
        scratch[rows - pad:rows] = fill

    body_cp.wait()

    @pl.when(i > 0)
    def _():
        top_cp.wait()

    @pl.when(i < nb - 1)
    def _():
        bot_cp.wait()

    xc = scratch[...] - mean[None, None, :]          # (rows, L1, H); 0 in halo
    zcol = jnp.zeros((rows, pad, h), jnp.float32)
    xp = jnp.concatenate([zcol, xc, zcol], axis=1)   # column zero-halo, once

    # Per-channel accumulation (pure VPU FMAs); ONE cross-lane reduction at the
    # end instead of 49.  The 7 column-shifted views are staged once per dj and
    # shared by the 7 row taps (only one is live at a time).  With a single
    # output channel an MXU/im2col formulation has N <= 7 and loses to the VPU,
    # so the contraction intentionally stays off the MXU.
    acc = jnp.zeros((tl0, l1, h), jnp.float32)
    for dj in range(k):
        sh = xp[:, dj:dj + l1, :]                    # (rows, L1, H)
        for di in range(k):
            w = w_ref[di * k + dj, :]                # (H,) BN1-scaled tap
            acc = acc + w[None, None, :] * sh[di:di + tl0]
    out_ref[0] = jnp.sum(acc, axis=-1)               # (TL0, L1), lane-dense


# ---------------------------------------------------------------------------
# Kernel 3: BatchNorm2d(1) application (batch stats) + Sigmoid, tiled.
# ---------------------------------------------------------------------------
def _bn_sigmoid_kernel(mean_ref, inv_ref, c_ref, o_ref):
    o_ref[...] = jax.nn.sigmoid((c_ref[...] - mean_ref[0]) * inv_ref[0])


# ---------------------------------------------------------------------------
# Tile-size heuristic
# ---------------------------------------------------------------------------
def _auto_tile_rows(l0, l1, d, h):
    """Largest multiple-of-8 divisor of L0 whose per-tile working set is small.

    Budget is deliberately conservative (~4 MiB of f32 live data per tile) so
    that double-buffered BlockSpec I/O plus in-kernel temporaries fit the
    scoped-VMEM limits on every generation (v5e 16 MiB default, v6e 32 MiB,
    v7x 64 MiB physical / 32 MiB default scoped).
    """
    per_row = 4 * l1 * max(6 * d + 2 * h, 5 * h)     # rough f32 bytes / row
    cap = max(8, (4 * 2 ** 20) // max(per_row, 1))
    cands = [t for t in range(8, l0 + 1, 8) if l0 % t == 0 and t <= cap]
    return max(cands) if cands else l0


# ---------------------------------------------------------------------------
# Wrapper
# ---------------------------------------------------------------------------
def contact_cnn_v2_forward(z0, z1, params, tl0=None):
    w1 = params["w1"]                                # (2D, H) fused [dif; mul]
    w2 = params["w2"]                                # (K, K, H) symmetrized
    B, L0, D = z0.shape
    L1 = z1.shape[1]
    H = w1.shape[1]
    K = w2.shape[0]
    pad = K // 2

    if tl0 is None:
        tl0 = _auto_tile_rows(L0, L1, D, H)
    assert L0 % tl0 == 0, (L0, tl0)
    assert tl0 == L0 or tl0 % 8 == 0, tl0            # keep (8,128)-friendly tiles
    nb0 = L0 // tl0
    assert nb0 == 1 or tl0 >= pad, (tl0, pad)        # row halo is read from HBM

    cparams = pltpu.CompilerParams(
        dimension_semantics=("parallel", "parallel"),  # B and L0-tiles -> both v7x TCs
        vmem_limit_bytes=32 * 1024 * 1024,
    )

    # --- Kernel 1: broadcast + fused 1x1 conv + ReLU, plus BN1 partials ---
    hidden, s1, s2 = pl.pallas_call(
        _hidden_kernel,
        out_shape=(
            jax.ShapeDtypeStruct((B, L0, L1, H), jnp.float32),
            jax.ShapeDtypeStruct((B, nb0, 1, H), jnp.float32),
            jax.ShapeDtypeStruct((B, nb0, 1, H), jnp.float32),
        ),
        grid=(B, nb0),
        in_specs=[
            pl.BlockSpec((1, tl0, D), lambda b, i: (b, i, 0)),
            pl.BlockSpec((1, L1, D), lambda b, i: (b, 0, 0)),
            pl.BlockSpec((2 * D, H), lambda b, i: (0, 0)),
        ],
        out_specs=(
            pl.BlockSpec((1, tl0, L1, H), lambda b, i: (b, i, 0, 0)),
            pl.BlockSpec((1, 1, 1, H), lambda b, i: (b, i, 0, 0)),
            pl.BlockSpec((1, 1, 1, H), lambda b, i: (b, i, 0, 0)),
        ),
        compiler_params=cparams,
    )(z0, z1, w1)

    # --- BN1 batch stats from the per-tile partials (tiny reduction in JAX) ---
    n1 = float(B * L0 * L1)
    mean1 = jnp.sum(s1, axis=(0, 1, 2)) / n1                        # (H,)
    var1 = jnp.maximum(jnp.sum(s2, axis=(0, 1, 2)) / n1 - mean1 * mean1, 0.0)
    inv1 = jax.lax.rsqrt(var1 + EPS)
    w2_scaled = w2.reshape(K * K, H) * inv1[None, :]   # fold BN1 scale into conv
    mean1_2d = mean1.reshape(1, H)

    # --- Kernel 2: fused BN1-normalize + pad + 7x7 conv (H -> 1), row-tiled ---
    conv_out = pl.pallas_call(
        functools.partial(_conv_bn1_kernel, K),
        out_shape=jax.ShapeDtypeStruct((B, L0, L1), jnp.float32),
        grid=(B, nb0),
        in_specs=[
            pl.BlockSpec((1, H), lambda b, i: (0, 0)),
            pl.BlockSpec((K * K, H), lambda b, i: (0, 0)),
            pl.BlockSpec(memory_space=pl.ANY),       # hidden in HBM; manual halo DMA
        ],
        out_specs=pl.BlockSpec((1, tl0, L1), lambda b, i: (b, i, 0)),
        scratch_shapes=[
            pltpu.VMEM((tl0 + 2 * pad, L1, H), jnp.float32),
            pltpu.SemaphoreType.DMA((3,)),
        ],
        compiler_params=cparams,
    )(mean1_2d, w2_scaled, hidden)
    # conv2 bias is exactly 0 (uniform_(0, 0)); nothing to add.

    # --- BN2 batch stats (scalar; conv_out is H-times smaller than hidden) ---
    mean2 = jnp.mean(conv_out)
    var2 = jnp.mean(jnp.square(conv_out - mean2))
    inv2 = jax.lax.rsqrt(var2 + EPS)

    # --- Kernel 3: BN2 apply + Sigmoid, tiled elementwise, scalars via SMEM ---
    out = pl.pallas_call(
        _bn_sigmoid_kernel,
        out_shape=jax.ShapeDtypeStruct((B, L0, L1), jnp.float32),
        grid=(B, nb0),
        in_specs=[
            pl.BlockSpec(memory_space=pltpu.MemorySpace.SMEM),
            pl.BlockSpec(memory_space=pltpu.MemorySpace.SMEM),
            pl.BlockSpec((1, tl0, L1), lambda b, i: (b, i, 0)),
        ],
        out_specs=pl.BlockSpec((1, tl0, L1), lambda b, i: (b, i, 0)),
        compiler_params=pltpu.CompilerParams(
            dimension_semantics=("parallel", "parallel")),
    )(mean2.reshape(1), inv2.reshape(1), conv_out)

    return out[:, None, :, :]                        # NCHW (B, 1, L0, L1)


# ---------------------------------------------------------------------------
# Deterministic parameter init (matches shapes / init semantics of __init__)
# ---------------------------------------------------------------------------
def init_params(key, embed_dim, hidden_dim, width):
    k1, k2 = jax.random.split(key)
    # Conv2d(2D, H, 1) weight ~ N(0, 1): (H, 2D, 1, 1) -> fused (2D, H).  The
    # first D rows act on |z0 - z1|, the last D on z0 * z1 (z_cat order).
    w1 = jnp.transpose(
        jax.random.normal(k1, (hidden_dim, 2 * embed_dim), jnp.float32))
    # Conv2d(H, 1, width, padding=width//2) weight ~ N(0, 1), then clip().
    w2 = jax.random.normal(k2, (1, hidden_dim, width, width), jnp.float32)
    w2 = 0.5 * (w2 + jnp.swapaxes(w2, 2, 3))         # clip(): spatial symmetrize
    w2 = jnp.transpose(w2[0], (1, 2, 0))             # (K, K, H)
    return {"w1": w1, "w2": w2}


# ---------------------------------------------------------------------------
# Pure-JAX reference (independent formulation, for in-script correctness check)
# ---------------------------------------------------------------------------
def reference_forward(z0, z1, params):
    w1, w2 = params["w1"], params["w2"]
    dif = jnp.abs(z0[:, :, None, :] - z1[:, None, :, :])
    mul = z0[:, :, None, :] * z1[:, None, :, :]
    c = jnp.concatenate([dif, mul], axis=-1) @ w1
    c = jnp.maximum(c, 0.0)
    m = c.mean(axis=(0, 1, 2))
    v = jnp.mean(jnp.square(c - m), axis=(0, 1, 2))
    c = (c - m) / jnp.sqrt(v + EPS)
    K = w2.shape[0]
    pad = K // 2
    B, L0, L1, H = c.shape
    p = jnp.pad(c, ((0, 0), (pad, pad), (pad, pad), (0, 0)))
    out = jnp.zeros((B, L0, L1), jnp.float32)
    for di in range(K):
        for dj in range(K):
            out = out + jnp.einsum(
                "bijh,h->bij", p[:, di:di + L0, dj:dj + L1, :], w2[di, dj])
    m2 = out.mean()
    v2 = jnp.mean(jnp.square(out - m2))
    out = jax.nn.sigmoid((out - m2) / jnp.sqrt(v2 + EPS))
    return out[:, None, :, :]


if __name__ == "__main__":
    embed_dim, hidden_dim, width = 8, 32, 7
    B, L = 2, 16
    key = jax.random.PRNGKey(0)
    kp, kz0, kz1 = jax.random.split(key, 3)
    params = init_params(kp, embed_dim, hidden_dim, width)
    z0 = jax.random.normal(kz0, (B, L, embed_dim), jnp.float32)
    z1 = jax.random.normal(kz1, (B, L, embed_dim), jnp.float32)

    # tl0=8 -> two row tiles per batch: exercises both halo-DMA directions and
    # the mean-filled (fused padding) borders of the conv kernel.
    out = contact_cnn_v2_forward(z0, z1, params, tl0=8)
    out = jax.block_until_ready(out)

    ref = reference_forward(z0, z1, params)
    assert out.shape == (B, 1, L, L), out.shape
    assert jnp.allclose(out, ref, atol=1e-4, rtol=1e-4), float(
        jnp.max(jnp.abs(out - ref)))
    print("KERNEL_OK")
</pallas_src>

<mosaic_0001>
module attributes {stable_mosaic.version = 11 : i64} {
  func.func @_hidden_kernel(%arg0: i32, %arg1: i32, %arg2: memref<1x8x8xf32, #tpu.memory_space<vmem>>, %arg3: memref<1x16x8xf32, #tpu.memory_space<vmem>>, %arg4: memref<16x32xf32, #tpu.memory_space<vmem>>, %arg5: memref<1x8x16x32xf32, #tpu.memory_space<vmem>>, %arg6: memref<1x1x1x32xf32, #tpu.memory_space<vmem>>, %arg7: memref<1x1x1x32xf32, #tpu.memory_space<vmem>>) attributes {dimension_semantics = [#tpu.dimension_semantics<parallel>, #tpu.dimension_semantics<parallel>], iteration_bounds = array<i64: 2, 2>, scalar_prefetch = 0 : i64, scratch_operands = 0 : i64, tpu.core_type = #tpu.core_type<tc>, window_params = [{transform_indices = @transform_0, window_bounds = array<i64: 1, 8, 8>}, {transform_indices = @transform_1, window_bounds = array<i64: 1, 16, 8>}, {pipeline_mode = #tpu.pipeline_mode<synchronous>, transform_indices = @transform_2, window_bounds = array<i64: 16, 32>}, {transform_indices = @transform_3, window_bounds = array<i64: 1, 8, 16, 32>}, {transform_indices = @transform_4, window_bounds = array<i64: 1, 1, 1, 32>}, {transform_indices = @transform_5, window_bounds = array<i64: 1, 1, 1, 32>}]} {
    %c0 = arith.constant 0 : index
    %c0_0 = arith.constant 0 : index
    %c0_1 = arith.constant 0 : index
    %0 = vector.load %arg2[%c0, %c0_0, %c0_1] : memref<1x8x8xf32, #tpu.memory_space<vmem>>, vector<1x8x8xf32>
    %1 = vector.shape_cast %0 : vector<1x8x8xf32> to vector<8x8xf32>
    %c0_2 = arith.constant 0 : index
    %c0_3 = arith.constant 0 : index
    %c0_4 = arith.constant 0 : index
    %2 = vector.load %arg3[%c0_2, %c0_3, %c0_4] : memref<1x16x8xf32, #tpu.memory_space<vmem>>, vector<1x16x8xf32>
    %3 = vector.shape_cast %2 : vector<1x16x8xf32> to vector<16x8xf32>
    %4 = vector.shape_cast %1 : vector<8x8xf32> to vector<8x1x8xf32>
    %5 = vector.shape_cast %3 : vector<16x8xf32> to vector<1x16x8xf32>
    %6 = vector.broadcast %4 : vector<8x1x8xf32> to vector<8x16x8xf32>
    %7 = vector.broadcast %5 : vector<1x16x8xf32> to vector<8x16x8xf32>
    %8 = arith.subf %6, %7 : vector<8x16x8xf32>
    %9 = math.absf %8 : vector<8x16x8xf32>
    %10 = vector.shape_cast %1 : vector<8x8xf32> to vector<8x1x8xf32>
    %11 = vector.shape_cast %3 : vector<16x8xf32> to vector<1x16x8xf32>
    %12 = vector.broadcast %10 : vector<8x1x8xf32> to vector<8x16x8xf32>
    %13 = vector.broadcast %11 : vector<1x16x8xf32> to vector<8x16x8xf32>
    %14 = arith.mulf %12, %13 : vector<8x16x8xf32>
    %15 = tpu.concatenate %9, %14 in 2 : vector<8x16x8xf32>, vector<8x16x8xf32> -> vector<8x16x16xf32>
    %16 = vector.shape_cast %15 : vector<8x16x16xf32> to vector<128x16xf32>
    %c0_5 = arith.constant 0 : index
    %c0_6 = arith.constant 0 : index
    %17 = vector.load %arg4[%c0_5, %c0_6] : memref<16x32xf32, #tpu.memory_space<vmem>>, vector<16x32xf32>
    %cst = arith.constant dense<0.000000e+00> : vector<128x32xf32>
    %18 = tpu.matmul %16, %17, %cst {dimension_numbers = #tpu.dot_dimension_numbers<[1], [0], [0], [1], [0, 0, 1, 1], [], []>} : vector<128x16xf32>, vector<16x32xf32>, vector<128x32xf32> -> vector<128x32xf32>
    %cst_7 = arith.constant 0.000000e+00 : f32
    %19 = vector.broadcast %cst_7 : f32 to vector<128x32xf32>
    %20 = arith.maximumf %18, %19 : vector<128x32xf32>
    %21 = vector.shape_cast %20 : vector<128x32xf32> to vector<8x16x32xf32>
    %c0_8 = arith.constant 0 : index
    %c0_9 = arith.constant 0 : index
    %c0_10 = arith.constant 0 : index
    %c0_11 = arith.constant 0 : index
    %22 = vector.load %arg5[%c0_8, %c0_9, %c0_10, %c0_11] : memref<1x8x16x32xf32, #tpu.memory_space<vmem>>, vector<1x8x16x32xf32>
    %23 = vector.shape_cast %22 : vector<1x8x16x32xf32> to vector<8x16x32xf32>
    %24 = vector.shape_cast %21 : vector<8x16x32xf32> to vector<1x8x16x32xf32>
    tpu.vector_store %arg5[%c0_8, %c0_9, %c0_10, %c0_11], %24 {strides = array<i32>} : memref<1x8x16x32xf32, #tpu.memory_space<vmem>>, vector<1x8x16x32xf32>,
    %cst_12 = arith.constant dense<0.000000e+00> : vector<32xf32>
    %25 = vector.multi_reduction <add>, %20, %cst_12 [0] : vector<128x32xf32> to vector<32xf32>
    %26 = vector.shape_cast %25 : vector<32xf32> to vector<1x32xf32>
    %c0_13 = arith.constant 0 : index
    %c0_14 = arith.constant 0 : index
    %c0_15 = arith.constant 0 : index
    %c0_16 = arith.constant 0 : index
    %27 = vector.load %arg6[%c0_13, %c0_14, %c0_15, %c0_16] : memref<1x1x1x32xf32, #tpu.memory_space<vmem>>, vector<1x1x1x32xf32>
    %28 = vector.shape_cast %27 : vector<1x1x1x32xf32> to vector<1x32xf32>
    %29 = vector.shape_cast %26 : vector<1x32xf32> to vector<1x1x1x32xf32>
    tpu.vector_store %arg6[%c0_13, %c0_14, %c0_15, %c0_16], %29 {strides = array<i32>} : memref<1x1x1x32xf32, #tpu.memory_space<vmem>>, vector<1x1x1x32xf32>,
    %30 = arith.mulf %20, %20 : vector<128x32xf32>
    %cst_17 = arith.constant dense<0.000000e+00> : vector<32xf32>
    %31 = vector.multi_reduction <add>, %30, %cst_17 [0] : vector<128x32xf32> to vector<32xf32>
    %32 = vector.shape_cast %31 : vector<32xf32> to vector<1x32xf32>
    %c0_18 = arith.constant 0 : index
    %c0_19 = arith.constant 0 : index
    %c0_20 = arith.constant 0 : index
    %c0_21 = arith.constant 0 : index
    %33 = vector.load %arg7[%c0_18, %c0_19, %c0_20, %c0_21] : memref<1x1x1x32xf32, #tpu.memory_space<vmem>>, vector<1x1x1x32xf32>
    %34 = vector.shape_cast %33 : vector<1x1x1x32xf32> to vector<1x32xf32>
    %35 = vector.shape_cast %32 : vector<1x32xf32> to vector<1x1x1x32xf32>
    tpu.vector_store %arg7[%c0_18, %c0_19, %c0_20, %c0_21], %35 {strides = array<i32>} : memref<1x1x1x32xf32, #tpu.memory_space<vmem>>, vector<1x1x1x32xf32>,
    return
  }
  func.func @transform_0(%arg0: i32, %arg1: i32) -> (i32, i32, i32) {
    %c0_i32 = arith.constant 0 : i32
    %c0_i32_0 = arith.constant 0 : i32
    return %arg0, %arg1, %c0_i32 : i32, i32, i32
  }
  func.func @transform_1(%arg0: i32, %arg1: i32) -> (i32, i32, i32) {
    %c0_i32 = arith.constant 0 : i32
    %c0_i32_0 = arith.constant 0 : i32
    %c0_i32_1 = arith.constant 0 : i32
    return %arg0, %c0_i32, %c0_i32_0 : i32, i32, i32
  }
  func.func @transform_2(%arg0: i32, %arg1: i32) -> (i32, i32) {
    %c0_i32 = arith.constant 0 : i32
    %c0_i32_0 = arith.constant 0 : i32
    %c0_i32_1 = arith.constant 0 : i32
    return %c0_i32, %c0_i32_0 : i32, i32
  }
  func.func @transform_3(%arg0: i32, %arg1: i32) -> (i32, i32, i32, i32) {
    %c0_i32 = arith.constant 0 : i32
    %c0_i32_0 = arith.constant 0 : i32
    %c0_i32_1 = arith.constant 0 : i32
    return %arg0, %arg1, %c0_i32, %c0_i32_0 : i32, i32, i32, i32
  }
  func.func @transform_4(%arg0: i32, %arg1: i32) -> (i32, i32, i32, i32) {
    %c0_i32 = arith.constant 0 : i32
    %c0_i32_0 = arith.constant 0 : i32
    %c0_i32_1 = arith.constant 0 : i32
    return %arg0, %arg1, %c0_i32, %c0_i32_0 : i32, i32, i32, i32
  }
  func.func @transform_5(%arg0: i32, %arg1: i32) -> (i32, i32, i32, i32) {
    %c0_i32 = arith.constant 0 : i32
    %c0_i32_0 = arith.constant 0 : i32
    %c0_i32_1 = arith.constant 0 : i32
    return %arg0, %arg1, %c0_i32, %c0_i32_0 : i32, i32, i32, i32
  }
}

</mosaic_0001>

<llo_original>
// kernel: tpu_custom_call.1
$region0: #{tpu_custom_call.1}
  #allocation0 [shape = 'u32[]', space=smem, size = 0x4, offset = 0x4, fixed_abs, tag = 'smem constant byte address 0x4 - core index']
  #allocation1 [shape = 'u32[144,128]{1,0:T(1,128)}', space=vmem, size = 0x12000, scoped, tag = 'internal scratch']
  %s0 = inlined_call_operand.vmem [shape: f32[2,16,8], index: 0, kind: input, shape index: {}]
  %s1 = inlined_call_operand.vmem [shape: f32[2,16,8], index: 1, kind: input, shape index: {}]
  %s2 = inlined_call_operand.vmem [shape: f32[16,32], index: 2, kind: input, shape index: {}]
  %s3 = inlined_call_operand.hbm [shape: f32[2,16,16,32], index: 3, kind: output, shape index: {0}]
  %s4 = inlined_call_operand.hbm [shape: f32[2,2,1,32], index: 4, kind: output, shape index: {1}]
  %s5 = inlined_call_operand.hbm [shape: f32[2,2,1,32], index: 5, kind: output, shape index: {2}]
  %6 = xla_tuple %s3, %s4, %s5
  %s7 = sld [smem:[#allocation0]]
  $region61: #{tpu_custom_call.1} parent=0
    _
  %s9 = ssub.s32 1, %s7
  %s10 = scalar_select 0, %s9, %s7
  $region1: #{tpu_custom_call.1} parent=0
    #allocation2 [shape = 'u8[131072]{0}', space=vmem, size = 0x20000, scoped, tag = 'output window, operand 0']
    #allocation3 [shape = 's32[2]{0}', space=sflag, size = 0x8, scoped, tag = 'scoped memory for tpu_custom_call.1']
    #allocation4 [shape = 'u8[1024]{0}', space=vmem, size = 0x400, scoped, tag = 'output window, operand 1']
    #allocation5 [shape = 's32[2]{0}', space=sflag, size = 0x8, scoped, tag = 'scoped memory for tpu_custom_call.1']
    #allocation6 [shape = 'u8[1024]{0}', space=vmem, size = 0x400, scoped, tag = 'output window, operand 2']
    %11 = vsyncpa [#allocation3], 0
    %s12 = scalar_lea.sflag [#allocation3], 1
    %13 = vsyncpa %s12, 0
    %14 = vsyncpa [#allocation5], 0
    %s15 = scalar_lea.sflag [#allocation5], 1
    %16 = vsyncpa %s15, 0
    loop: start=0, step=1, limit=6
    $region2: #{tpu_custom_call.1} parent=1 // loop_pre_header
      _
    $region3: #{tpu_custom_call.1} parent=1 // loop_header
      %s18 = sphi 0, %s22
      %p19 = scmp.ge.s32.totalorder %s18, 6
      %s25 = sphi 0, %s37
      %s26 = sphi 0, %s33
      %s27 = sphi 0, %s25
      %s28 = sphi 0, %s26
      %s29 = sphi 0, %s27
      %s30 = sphi 0, %s28
      %s42 = sphi 0, %s44
      %s45 = sphi 0, %s42
      %s46 = sphi 0, %s45
      %s62 = sphi 0, %s46
      %s68 = sphi 0, %s70
      %s71 = sphi 0, %s68
      %s72 = sphi 0, %s71
      %s88 = sphi 0, %s72
      %s92 = sphi 0, %s92
      %s94 = sphi 0, %s92
      %s95 = sphi 0, %s94
      %s109 = sphi 0, %s95
      %s117 = sphi 0, %s119
      %s120 = sphi 0, %s117
      %s121 = sphi 0, %s120
      %s137 = sphi 0, %s121
      %s145 = sphi 0, %s147
      %s148 = sphi 0, %s145
      %s149 = sphi 0, %s148
      %s165 = sphi 0, %s149
      %s173 = sphi 0, %s175
      %s176 = sphi 0, %s173
      %s177 = sphi 0, %s176
      %s193 = sphi 0, %s177
    $region4: #{tpu_custom_call.1} parent=1 // loop_header_branch
      %21 = sbr.rel (%p19) target = $region8
    $region5: #{tpu_custom_call.1} parent=1 // loop_body
      %s23 = ssub.s32 %s18, 1
      %s24 = ssub.s32 %s18, 2
      %s31 = sadd.s32 1, %s26
      %p32 = scmp.ge.s32.totalorder %s31, 2
      %s33 = scalar_select %p32, 0, %s31
      %s34 = sadd.s32 1, %s25
      %s35 = scalar_select %p32, %s34, %s25
      %p36 = scmp.ge.s32.totalorder %s35, 2
      %s37 = scalar_select %p36, 0, %s35
      %s38 = ssub.s32 %s25, %s37
      %s39 = ssub.s32 %s26, %s33
      %s40 = sor.u32 %s38, %s39
      %p41 = scmp.eq.s32.totalorder %s40, 0
      %s43 = sadd.s32 %s42, 1
      %s44 = scalar_select %p41, %s42, %s43
      %p47 = pneg %p41
      %p48 = scmp.eq.s32.totalorder %s18, 3
      %p49 = por %p47, %p48
      %p50 = scmp.ne.s32.totalorder %s42, %s45
      %p51 = scmp.eq.s32.totalorder %s18, 0
      %p52 = por %p50, %p51
      %p53 = scmp.ne.s32.totalorder %s42, %s45
      %p54 = scmp.eq.s32.totalorder %s23, 3
      %p55 = por %p53, %p54
      %p56 = scmp.ne.s32.totalorder %s45, %s46
      %p57 = scmp.eq.s32.totalorder %s23, 0
      %p58 = por %p56, %p57
      %p59 = scmp.ne.s32.totalorder %s45, %s46
      %p60 = scmp.eq.s32.totalorder %s24, 3
      %p61 = por %p59, %p60
      %p63 = scmp.ne.s32.totalorder %s46, %s62
      %p64 = scmp.eq.s32.totalorder %s24, 0
      %p65 = por %p63, %p64
      %s66 = ssub.s32 %s25, %s37
      %p67 = scmp.eq.s32.totalorder %s66, 0
      %s69 = sadd.s32 %s68, 1
      %s70 = scalar_select %p67, %s68, %s69
      %p73 = pneg %p67
      %p74 = scmp.eq.s32.totalorder %s18, 3
      %p75 = por %p73, %p74
      %p76 = scmp.ne.s32.totalorder %s68, %s71
      %p77 = scmp.eq.s32.totalorder %s18, 0
      %p78 = por %p76, %p77
      %p79 = scmp.ne.s32.totalorder %s68, %s71
      %p80 = scmp.eq.s32.totalorder %s23, 3
      %p81 = por %p79, %p80
      %p82 = scmp.ne.s32.totalorder %s71, %s72
      %p83 = scmp.eq.s32.totalorder %s23, 0
      %p84 = por %p82, %p83
      %p85 = scmp.ne.s32.totalorder %s71, %s72
      %p86 = scmp.eq.s32.totalorder %s24, 3
      %p87 = por %p85, %p86
      %p89 = scmp.ne.s32.totalorder %s72, %s88
      %p90 = scmp.eq.s32.totalorder %s24, 0
      %p91 = por %p89, %p90
      %s93 = sadd.s32 %s92, 1
      %p96 = scmp.eq.s32.totalorder %s18, 3
      %p97 = scmp.ne.s32.totalorder %s92, %s94
      %p98 = scmp.eq.s32.totalorder %s18, 0
      %p99 = por %p97, %p98
      %p100 = scmp.ne.s32.totalorder %s92, %s94
      %p101 = scmp.eq.s32.totalorder %s23, 3
      %p102 = por %p100, %p101
      %p103 = scmp.ne.s32.totalorder %s94, %s95
      %p104 = scmp.eq.s32.totalorder %s23, 0
      %p105 = por %p103, %p104
      %p106 = scmp.ne.s32.totalorder %s94, %s95
      %p107 = scmp.eq.s32.totalorder %s24, 3
      %p108 = por %p106, %p107
      %p110 = scmp.ne.s32.totalorder %s95, %s109
      %p111 = scmp.eq.s32.totalorder %s24, 0
      %p112 = por %p110, %p111
      %s113 = ssub.s32 %s25, %s37
      %s114 = ssub.s32 %s26, %s33
      %s115 = sor.u32 %s113, %s114
      %p116 = scmp.eq.s32.totalorder %s115, 0
      %s118 = sadd.s32 %s117, 1
      %s119 = scalar_select %p116, %s117, %s118
      %p122 = pneg %p116
      %p123 = scmp.eq.s32.totalorder %s18, 3
      %p124 = por %p122, %p123
      %p125 = scmp.ne.s32.totalorder %s117, %s120
      %p126 = scmp.eq.s32.totalorder %s18, 0
      %p127 = por %p125, %p126
      %p128 = scmp.ne.s32.totalorder %s117, %s120
      %p129 = scmp.eq.s32.totalorder %s23, 3
      %p130 = por %p128, %p129
      %p131 = scmp.ne.s32.totalorder %s120, %s121
      %p132 = scmp.eq.s32.totalorder %s23, 0
      %p133 = por %p131, %p132
      %p134 = scmp.ne.s32.totalorder %s120, %s121
      %p135 = scmp.eq.s32.totalorder %s24, 3
      %p136 = por %p134, %p135
      %p138 = scmp.ne.s32.totalorder %s121, %s137
      %p139 = scmp.eq.s32.totalorder %s24, 0
      %p140 = por %p138, %p139
      %s141 = ssub.s32 %s25, %s37
      %s142 = ssub.s32 %s26, %s33
      %s143 = sor.u32 %s141, %s142
      %p144 = scmp.eq.s32.totalorder %s143, 0
      %s146 = sadd.s32 %s145, 1
      %s147 = scalar_select %p144, %s145, %s146
      %p150 = pneg %p144
      %p151 = scmp.eq.s32.totalorder %s18, 3
      %p152 = por %p150, %p151
      %p153 = scmp.ne.s32.totalorder %s145, %s148
      %p154 = scmp.eq.s32.totalorder %s18, 0
      %p155 = por %p153, %p154
      %p156 = scmp.ne.s32.totalorder %s145, %s148
      %p157 = scmp.eq.s32.totalorder %s23, 3
      %p158 = por %p156, %p157
      %p159 = scmp.ne.s32.totalorder %s148, %s149
      %p160 = scmp.eq.s32.totalorder %s23, 0
      %p161 = por %p159, %p160
      %p162 = scmp.ne.s32.totalorder %s148, %s149
      %p163 = scmp.eq.s32.totalorder %s24, 3
      %p164 = por %p162, %p163
      %p166 = scmp.ne.s32.totalorder %s149, %s165
      %p167 = scmp.eq.s32.totalorder %s24, 0
      %p168 = por %p166, %p167
      %s169 = ssub.s32 %s25, %s37
      %s170 = ssub.s32 %s26, %s33
      %s171 = sor.u32 %s169, %s170
      %p172 = scmp.eq.s32.totalorder %s171, 0
      %s174 = sadd.s32 %s173, 1
      %s175 = scalar_select %p172, %s173, %s174
      %p178 = pneg %p172
      %p179 = scmp.eq.s32.totalorder %s18, 3
      %p180 = por %p178, %p179
      %p181 = scmp.ne.s32.totalorder %s173, %s176
      %p182 = scmp.eq.s32.totalorder %s18, 0
      %p183 = por %p181, %p182
      %p184 = scmp.ne.s32.totalorder %s173, %s176
      %p185 = scmp.eq.s32.totalorder %s23, 3
      %p186 = por %p184, %p185
      %p187 = scmp.ne.s32.totalorder %s176, %s177
      %p188 = scmp.eq.s32.totalorder %s23, 0
      %p189 = por %p187, %p188
      %p190 = scmp.ne.s32.totalorder %s176, %s177
      %p191 = scmp.eq.s32.totalorder %s24, 3
      %p192 = por %p190, %p191
      %p194 = scmp.ne.s32.totalorder %s177, %s193
      %p195 = scmp.eq.s32.totalorder %s24, 0
      %p196 = por %p194, %p195
      %p197 = scmp.le.s32.totalorder 1, %s18
      %p198 = scmp.lt.s32.totalorder %s18, 5
      %p199 = pnand %p197, %p198
      %p200 = pneg %p199
      // Predicated region
      $region9: #{tpu_custom_call.1} parent=5 // pred_check
        _
      $region10: #{tpu_custom_call.1} parent=5 // pred_check_branch
        %202 = sbr.rel (%p199) target = $region12
      $region11: #{tpu_custom_call.1} parent=5 // pred_region
        %s203 = ssub.s32 %s18, 1
        // Predicated region
        $region13: #{tpu_custom_call.1} parent=11 // pred_check
          %p204 = pneg %p105
        $region14: #{tpu_custom_call.1} parent=11 // pred_check_branch
          %206 = sbr.rel (%p204) target = $region16
        $region15: #{tpu_custom_call.1} parent=11 // pred_region
          _
        $region16: #{tpu_custom_call.1} parent=11 // pred_fallthru
          _
      $region12: #{tpu_custom_call.1} parent=5 // pred_fallthru
        _
      %p207 = scmp.lt.s32.totalorder %s18, 4
      // Predicated region
      $region17: #{tpu_custom_call.1} parent=5 // pred_check
        %p208 = pneg %p207
      $region18: #{tpu_custom_call.1} parent=5 // pred_check_branch
        %210 = sbr.rel (%p208) target = $region20
      $region19: #{tpu_custom_call.1} parent=5 // pred_region
        // Predicated region
        $region21: #{tpu_custom_call.1} parent=19 // pred_check
          %p211 = pneg %p52
        $region22: #{tpu_custom_call.1} parent=19 // pred_check_branch
          %213 = sbr.rel (%p211) target = $region24
        $region23: #{tpu_custom_call.1} parent=19 // pred_region
          %p214 = scmp.lt.s32.totalorder %s25, 1
          %s215 = scalar_select %p214, %s25, 1
          %p216 = scmp.lt.s32.totalorder %s26, 1
          %s217 = scalar_select %p216, %s26, 1
          %s218 = smul.addr %s215, 2
          %s219 = sadd.s32 %s217, %s218
          %s220 = smul.addr %s219, 8
          %s221 = scalar_lea.vmem %s0, %s220
        $region24: #{tpu_custom_call.1} parent=19 // pred_fallthru
          _
        // Predicated region
        $region25: #{tpu_custom_call.1} parent=19 // pred_check
          %p222 = pneg %p78
        $region26: #{tpu_custom_call.1} parent=19 // pred_check_branch
          %224 = sbr.rel (%p222) target = $region28
        $region27: #{tpu_custom_call.1} parent=19 // pred_region
          %p225 = scmp.lt.s32.totalorder %s25, 1
          %s226 = scalar_select %p225, %s25, 1
          %s227 = smul.addr %s226, 2
          %s228 = smul.addr %s227, 8
          %s229 = scalar_lea.vmem %s1, %s228
        $region28: #{tpu_custom_call.1} parent=19 // pred_fallthru
          _
      $region20: #{tpu_custom_call.1} parent=5 // pred_fallthru
        _
      %p230 = scmp.le.s32.totalorder 1, %s18
      %p231 = scmp.lt.s32.totalorder %s18, 5
      %p232 = pnand %p230, %p231
      %p233 = pneg %p232
      // Predicated region
      $region29: #{tpu_custom_call.1} parent=5 // pred_check
        _
      $region30: #{tpu_custom_call.1} parent=5 // pred_check_branch
        %235 = sbr.rel (%p232) target = $region32
      $region31: #{tpu_custom_call.1} parent=5 // pred_region
        %s236 = ssub.s32 %s18, 1
        %p237 = scmp.lt.s32.totalorder %s27, 1
        %s238 = scalar_select %p237, %s27, 1
        %p239 = scmp.lt.s32.totalorder %s28, 1
        %s240 = scalar_select %p239, %s28, 1
        %s241 = smul.addr %s238, 2
        %s242 = sadd.s32 %s240, %s241
        %s243 = smul.addr %s242, 8
        %s244 = scalar_lea.vmem %s0, %s243
        %p245 = pneg %p58
        %p246 = pneg %p55
        %p247 = scmp.lt.s32.totalorder %s27, 1
        %s248 = scalar_select %p247, %s27, 1
        %s249 = smul.addr %s248, 2
        %s250 = smul.addr %s249, 8
        %s251 = scalar_lea.vmem %s1, %s250
        %p252 = pneg %p84
        %p253 = pneg %p81
        %p254 = pneg %p105
        %p255 = pneg %p102
        %p256 = pneg %p133
        %p257 = pneg %p130
        %s258 = sand.u32 %s120, 1
        %s259 = scalar_lea.sflag [#allocation3], %s258
        %s260 = sand.u32 %s120, 1
        %s261 = smul.addr %s260, 128
        %s262 = scalar_lea.vmem [#allocation2], %s261
        %p263 = pneg %p161
        %p264 = pneg %p158
        %s265 = sand.u32 %s23, 1
        %s266 = scalar_lea.sflag [#allocation5], %s265
        %s267 = sand.u32 %s148, 1
        %s268 = scalar_lea.vmem [#allocation4], %s267
        %p269 = pneg %p189
        %p270 = pneg %p186
        %s271 = sand.u32 %s23, 1
        %s272 = scalar_lea.sflag [#allocation5], %s271
        %s273 = sand.u32 %s176, 1
        %s274 = scalar_lea.vmem [#allocation6], %s273
        %p275 = scmp.lt.s32.totalorder %s27, 1
        %s276 = scalar_select %p275, %s27, 1
        %p277 = scmp.lt.s32.totalorder %s28, 1
        %s278 = scalar_select %p277, %s28, 1
        %s279 = smul.addr %s276, 2
        %s280 = sadd.s32 %s278, %s279
        %s281 = smul.addr %s280, 8
        %s282 = scalar_lea.vmem %s0, %s281
        %p283 = scmp.lt.s32.totalorder %s27, 1
        %s284 = scalar_select %p283, %s27, 1
        %s285 = smul.addr %s284, 2
        %s286 = smul.addr %s285, 8
        %s287 = scalar_lea.vmem %s1, %s286
        %s288 = smul.u32 8, %s28
        %v289 = vld [vmem:[%s282] sm:$0xff]
        %v290 = vld [vmem:[%s287] sm:$0xff]
        %v291 = vld [vmem:[%s287 + $0x8] sm:$0xff]
        %v293 = vcombine.high %v289, %v289
        %v295 = vunpack.c.l.s4 1966171168
        %v296 = vunpack.c.0.s8 %v295
        %v297 = vlaneseq
        %v298 = vshrl.u32 %v297, 7
        %v299 = vsub.s32 %v296, %v298
        %v300 = vrot.slane %v289, %v299
        %v302 = vunpack.c.l.s4 1966171168
        %v303 = vunpack.c.0.s8 %v302
        %v304 = vlaneseq
        %v305 = vshrl.u32 %v304, 7
        %v306 = vsub.s32 %v303, %v305
        %v307 = vrot.slane %v293, %v306
        %v308 = vcombine.high %v300, %v300
        %v309 = vcombine.high %v307, %v307
        %v311 = vunpack.c.l.s4 1966171168
        %v312 = vunpack.c.0.s8 %v311
        %v313 = vlaneseq
        %v314 = vshrl.u32 %v313, 7
        %v315 = vsub.s32 %v312, %v314
        %v316 = vrot.slane %v300, %v315
        %v318 = vunpack.c.l.s4 1966171168
        %v319 = vunpack.c.0.s8 %v318
        %v320 = vlaneseq
        %v321 = vshrl.u32 %v320, 7
        %v322 = vsub.s32 %v319, %v321
        %v323 = vrot.slane %v307, %v322
        %v325 = vunpack.c.l.s4 1966171168
        %v326 = vunpack.c.0.s8 %v325
        %v327 = vlaneseq
        %v328 = vshrl.u32 %v327, 7
        %v329 = vsub.s32 %v326, %v328
        %v330 = vrot.slane %v308, %v329
        %v332 = vunpack.c.l.s4 1966171168
        %v333 = vunpack.c.0.s8 %v332
        %v334 = vlaneseq
        %v335 = vshrl.u32 %v334, 7
        %v336 = vsub.s32 %v333, %v335
        %v337 = vrot.slane %v309, %v336
        %v338 = vcombine.high %v316, %v316
        %v339 = vcombine.high %v323, %v323
        %v340 = vcombine.high %v330, %v330
        %v341 = vcombine.high %v337, %v337
        %v342 = vlaneseq
        %v343 = vshrl.u32 %v342, 7
        %v344 = vsub.s32 0, %v343
        %v345 = vrot.slane %v316, %v344
        %v346 = vlaneseq
        %v347 = vshrl.u32 %v346, 7
        %v348 = vsub.s32 0, %v347
        %v349 = vrot.slane %v330, %v348
        %v350 = vlaneseq
        %v351 = vshrl.u32 %v350, 7
        %v352 = vsub.s32 0, %v351
        %v353 = vrot.slane %v338, %v352
        %v354 = vlaneseq
        %v355 = vshrl.u32 %v354, 7
        %v356 = vsub.s32 0, %v355
        %v357 = vrot.slane %v340, %v356
        %v358 = vlaneseq
        %v359 = vshrl.u32 %v358, 7
        %v360 = vsub.s32 0, %v359
        %v361 = vrot.slane %v323, %v360
        %v362 = vlaneseq
        %v363 = vshrl.u32 %v362, 7
        %v364 = vsub.s32 0, %v363
        %v365 = vrot.slane %v337, %v364
        %v366 = vlaneseq
        %v367 = vshrl.u32 %v366, 7
        %v368 = vsub.s32 0, %v367
        %v369 = vrot.slane %v339, %v368
        %v370 = vlaneseq
        %v371 = vshrl.u32 %v370, 7
        %v372 = vsub.s32 0, %v371
        %v373 = vrot.slane %v341, %v372
        %v382 = vsub.f32 %v345, %v290
        %v383 = vsub.f32 %v345, %v291
        %v384 = vsub.f32 %v349, %v290
        %v385 = vsub.f32 %v349, %v291
        %v386 = vsub.f32 %v353, %v290
        %v387 = vsub.f32 %v353, %v291
        %v388 = vsub.f32 %v357, %v290
        %v389 = vsub.f32 %v357, %v291
        %v390 = vsub.f32 %v361, %v290
        %v391 = vsub.f32 %v361, %v291
        %v392 = vsub.f32 %v365, %v290
        %v393 = vsub.f32 %v365, %v291
        %v394 = vsub.f32 %v369, %v290
        %v395 = vsub.f32 %v369, %v291
        %v396 = vsub.f32 %v373, %v290
        %v397 = vsub.f32 %v373, %v291
        %v398 = vand.u32 2147483647, %v382
        %v399 = vand.u32 2147483647, %v383
        %v400 = vand.u32 2147483647, %v384
        %v401 = vand.u32 2147483647, %v385
        %v402 = vand.u32 2147483647, %v386
        %v403 = vand.u32 2147483647, %v387
        %v404 = vand.u32 2147483647, %v388
        %v405 = vand.u32 2147483647, %v389
        %v406 = vand.u32 2147483647, %v390
        %v407 = vand.u32 2147483647, %v391
        %v408 = vand.u32 2147483647, %v392
        %v409 = vand.u32 2147483647, %v393
        %v410 = vand.u32 2147483647, %v394
        %v411 = vand.u32 2147483647, %v395
        %v412 = vand.u32 2147483647, %v396
        %v413 = vand.u32 2147483647, %v397
        %v414 = vmul.f32 %v345, %v290
        %v415 = vmul.f32 %v345, %v291
        %v416 = vmul.f32 %v349, %v290
        %v417 = vmul.f32 %v349, %v291
        %v418 = vmul.f32 %v353, %v290
        %v419 = vmul.f32 %v353, %v291
        %v420 = vmul.f32 %v357, %v290
        %v421 = vmul.f32 %v357, %v291
        %v422 = vmul.f32 %v361, %v290
        %v423 = vmul.f32 %v361, %v291
        %v424 = vmul.f32 %v365, %v290
        %v425 = vmul.f32 %v365, %v291
        %v426 = vmul.f32 %v369, %v290
        %v427 = vmul.f32 %v369, %v291
        %v428 = vmul.f32 %v373, %v290
        %v429 = vmul.f32 %v373, %v291
        %446 = vrot.lane.b32.xlu0 %v414, 8
        %v447 = vpop.permute.xlu0 %446
        %448 = vrot.lane.b32.xlu0 %v415, 8
        %v449 = vpop.permute.xlu0 %448
        %450 = vrot.lane.b32.xlu0 %v416, 8
        %v451 = vpop.permute.xlu0 %450
        %452 = vrot.lane.b32.xlu0 %v417, 8
        %v453 = vpop.permute.xlu0 %452
        %454 = vrot.lane.b32.xlu0 %v418, 8
        %v455 = vpop.permute.xlu0 %454
        %456 = vrot.lane.b32.xlu0 %v419, 8
        %v457 = vpop.permute.xlu0 %456
        %458 = vrot.lane.b32.xlu0 %v420, 8
        %v459 = vpop.permute.xlu0 %458
        %460 = vrot.lane.b32.xlu0 %v421, 8
        %v461 = vpop.permute.xlu0 %460
        %462 = vrot.lane.b32.xlu0 %v422, 8
        %v463 = vpop.permute.xlu0 %462
        %464 = vrot.lane.b32.xlu0 %v423, 8
        %v465 = vpop.permute.xlu0 %464
        %466 = vrot.lane.b32.xlu0 %v424, 8
        %v467 = vpop.permute.xlu0 %466
        %468 = vrot.lane.b32.xlu0 %v425, 8
        %v469 = vpop.permute.xlu0 %468
        %470 = vrot.lane.b32.xlu0 %v426, 8
        %v471 = vpop.permute.xlu0 %470
        %472 = vrot.lane.b32.xlu0 %v427, 8
        %v473 = vpop.permute.xlu0 %472
        %474 = vrot.lane.b32.xlu0 %v428, 8
        %v475 = vpop.permute.xlu0 %474
        %476 = vrot.lane.b32.xlu0 %v429, 8
        %v477 = vpop.permute.xlu0 %476
        %vm494 = vcmask 64512
        %v495 = vsel %vm494, %v398, %v447
        %v496 = vsel %vm494, %v399, %v449
        %v497 = vsel %vm494, %v400, %v451
        %v498 = vsel %vm494, %v401, %v453
        %v499 = vsel %vm494, %v402, %v455
        %v500 = vsel %vm494, %v403, %v457
        %v501 = vsel %vm494, %v404, %v459
        %v502 = vsel %vm494, %v405, %v461
        %v503 = vsel %vm494, %v406, %v463
        %v504 = vsel %vm494, %v407, %v465
        %v505 = vsel %vm494, %v408, %v467
        %v506 = vsel %vm494, %v409, %v469
        %v507 = vsel %vm494, %v410, %v471
        %v508 = vsel %vm494, %v411, %v473
        %v509 = vsel %vm494, %v412, %v475
        %v510 = vsel %vm494, %v413, %v477
        %v511 = vld [vmem:[%s2] sm:$0xff]
        %v512 = vld [vmem:[%s2 + $0x8] sm:$0xff]
        %vm513 = vcmask 130048
        %v515 = vsel %vm513, %v495, 0
        %v518 = vsel %vm513, %v496, 0
        %v521 = vsel %vm513, %v497, 0
        %v524 = vsel %vm513, %v498, 0
        %v527 = vsel %vm513, %v499, 0
        %v530 = vsel %vm513, %v500, 0
        %v533 = vsel %vm513, %v501, 0
        %v536 = vsel %vm513, %v502, 0
        %v539 = vsel %vm513, %v503, 0
        %v542 = vsel %vm513, %v504, 0
        %v545 = vsel %vm513, %v505, 0
        %v548 = vsel %vm513, %v506, 0
        %v551 = vsel %vm513, %v507, 0
        %v554 = vsel %vm513, %v508, 0
        %v557 = vsel %vm513, %v509, 0
        %v560 = vsel %vm513, %v510, 0
        %562 = vmatprep.subr.mxu0 0.0
        %563 = vmatpush1.msra.mxu0 %v511
        %564 = vmatprep.subr.mxu0 0.0
        %565 = vmatpush1.msra.mxu0 %v512
        %566 = vmatprep.subr.mxu0 0.0
        %567 = vmatpush1.msra.mxu0 0.0
        %568 = vmatprep.subr.mxu0 0.0
        %569 = vmatpush1.msra.mxu0 0.0
        %570 = vmatprep.subr.mxu0 0.0
        %571 = vmatpush1.msra.mxu0 0.0
        %572 = vmatprep.subr.mxu0 0.0
        %573 = vmatpush1.msra.mxu0 0.0
        %574 = vmatprep.subr.mxu0 0.0
        %575 = vmatpush1.msra.mxu0 0.0
        %576 = vmatprep.subr.mxu0 0.0
        %577 = vmatpush1.msra.mxu0 0.0
        %578 = vmatprep.subr.mxu0 0.0
        %579 = vmatpush1.msra.mxu0 0.0
        %580 = vmatprep.subr.mxu0 0.0
        %581 = vmatpush1.msra.mxu0 0.0
        %582 = vmatprep.subr.mxu0 0.0
        %583 = vmatpush1.msra.mxu0 0.0
        %584 = vmatprep.subr.mxu0 0.0
        %585 = vmatpush1.msra.mxu0 0.0
        %586 = vmatprep.subr.mxu0 0.0
        %587 = vmatpush1.msra.mxu0 0.0
        %588 = vmatprep.subr.mxu0 0.0
        %589 = vmatpush1.msra.mxu0 0.0
        %590 = vmatprep.subr.mxu0 0.0
        %591 = vmatpush1.msra.mxu0 0.0
        %592 = vmatprep.subr.mxu0 0.0
        %593 = vmatpush1.msra.mxu0 0.0
        %594 = vmatprep.subr.mxu0 0.0
        %595 = vmatpush1.msra.mxu0 0.0
        %596 = vmatprep.subr.mxu0 0.0
        %597 = vmatpush1.msra.mxu0 0.0
        %598 = vmatprep.subr.mxu0 0.0
        %599 = vmatpush1.msra.mxu0 0.0
        %600 = vmatprep.subr.mxu0 0.0
        %601 = vmatpush1.msra.mxu0 0.0
        %602 = vmatprep.subr.mxu0 0.0
        %603 = vmatpush1.msra.mxu0 0.0
        %604 = vmatprep.subr.mxu0 0.0
        %605 = vmatpush1.msra.mxu0 0.0
        %606 = vmatprep.subr.mxu0 0.0
        %607 = vmatpush1.msra.mxu0 0.0
        %608 = vmatprep.subr.mxu0 0.0
        %609 = vmatpush1.msra.mxu0 0.0
        %610 = vmatprep.subr.mxu0 0.0
        %611 = vmatpush1.msra.mxu0 0.0
        %612 = vmatprep.subr.mxu0 0.0
        %613 = vmatpush1.msra.mxu0 0.0
        %614 = vmatprep.subr.mxu0 0.0
        %615 = vmatpush1.msra.mxu0 0.0
        %616 = vmatprep.subr.mxu0 0.0
        %617 = vmatpush1.msra.mxu0 0.0
        %618 = vmatprep.subr.mxu0 0.0
        %619 = vmatpush1.msra.mxu0 0.0
        %620 = vmatprep.subr.mxu0 0.0
        %621 = vmatpush1.msra.mxu0 0.0
        %622 = vmatprep.subr.mxu0 0.0
        %623 = vmatpush1.msra.mxu0 0.0
        %624 = vmatprep.subr.mxu0 0.0
        %625 = vmatpush1.msra.mxu0 0.0
        %626 = vmatprep.mubr.f32.mxu0 0.0
        %627 = vmatmul.mubr.f32.gmra.mrb[0].mxu0 %v515
        %v628 = vpop.f32.mrb[0].mxu0
        %v629 = vadd.f32 0.0, %v628
        %v630 = vpop.f32.mrb[0].mxu0
        %631 = vmatprep.mubr.f32.mxu0 0.0
        %632 = vmatmul.mubr.f32.gmra.mrb[0].mxu0 %v518
        %v633 = vpop.f32.mrb[0].mxu0
        %v634 = vadd.f32 0.0, %v633
        %v635 = vpop.f32.mrb[0].mxu0
        %636 = vmatprep.mubr.f32.mxu0 0.0
        %637 = vmatmul.mubr.f32.gmra.mrb[0].mxu0 %v521
        %v638 = vpop.f32.mrb[0].mxu0
        %v639 = vadd.f32 0.0, %v638
        %v640 = vpop.f32.mrb[0].mxu0
        %641 = vmatprep.mubr.f32.mxu0 0.0
        %642 = vmatmul.mubr.f32.gmra.mrb[0].mxu0 %v524
        %v643 = vpop.f32.mrb[0].mxu0
        %v644 = vadd.f32 0.0, %v643
        %v645 = vpop.f32.mrb[0].mxu0
        %646 = vmatprep.mubr.f32.mxu0 0.0
        %647 = vmatmul.mubr.f32.gmra.mrb[0].mxu0 %v527
        %v648 = vpop.f32.mrb[0].mxu0
        %v649 = vadd.f32 0.0, %v648
        %v650 = vpop.f32.mrb[0].mxu0
        %651 = vmatprep.mubr.f32.mxu0 0.0
        %652 = vmatmul.mubr.f32.gmra.mrb[0].mxu0 %v530
        %v653 = vpop.f32.mrb[0].mxu0
        %v654 = vadd.f32 0.0, %v653
        %v655 = vpop.f32.mrb[0].mxu0
        %656 = vmatprep.mubr.f32.mxu0 0.0
        %657 = vmatmul.mubr.f32.gmra.mrb[0].mxu0 %v533
        %v658 = vpop.f32.mrb[0].mxu0
        %v659 = vadd.f32 0.0, %v658
        %v660 = vpop.f32.mrb[0].mxu0
        %661 = vmatprep.mubr.f32.mxu0 0.0
        %662 = vmatmul.mubr.f32.gmra.mrb[0].mxu0 %v536
        %v663 = vpop.f32.mrb[0].mxu0
        %v664 = vadd.f32 0.0, %v663
        %v665 = vpop.f32.mrb[0].mxu0
        %666 = vmatprep.mubr.f32.mxu0 0.0
        %667 = vmatmul.mubr.f32.gmra.mrb[0].mxu0 %v539
        %v668 = vpop.f32.mrb[0].mxu0
        %v669 = vadd.f32 0.0, %v668
        %v670 = vpop.f32.mrb[0].mxu0
        %671 = vmatprep.mubr.f32.mxu0 0.0
        %672 = vmatmul.mubr.f32.gmra.mrb[0].mxu0 %v542
        %v673 = vpop.f32.mrb[0].mxu0
        %v674 = vadd.f32 0.0, %v673
        %v675 = vpop.f32.mrb[0].mxu0
        %676 = vmatprep.mubr.f32.mxu0 0.0
        %677 = vmatmul.mubr.f32.gmra.mrb[0].mxu0 %v545
        %v678 = vpop.f32.mrb[0].mxu0
        %v679 = vadd.f32 0.0, %v678
        %v680 = vpop.f32.mrb[0].mxu0
        %681 = vmatprep.mubr.f32.mxu0 0.0
        %682 = vmatmul.mubr.f32.gmra.mrb[0].mxu0 %v548
        %v683 = vpop.f32.mrb[0].mxu0
        %v684 = vadd.f32 0.0, %v683
        %v685 = vpop.f32.mrb[0].mxu0
        %686 = vmatprep.mubr.f32.mxu0 0.0
        %687 = vmatmul.mubr.f32.gmra.mrb[0].mxu0 %v551
        %v688 = vpop.f32.mrb[0].mxu0
        %v689 = vadd.f32 0.0, %v688
        %v690 = vpop.f32.mrb[0].mxu0
        %691 = vmatprep.mubr.f32.mxu0 0.0
        %692 = vmatmul.mubr.f32.gmra.mrb[0].mxu0 %v554
        %v693 = vpop.f32.mrb[0].mxu0
        %v694 = vadd.f32 0.0, %v693
        %v695 = vpop.f32.mrb[0].mxu0
        %696 = vmatprep.mubr.f32.mxu0 0.0
        %697 = vmatmul.mubr.f32.gmra.mrb[0].mxu0 %v557
        %v698 = vpop.f32.mrb[0].mxu0
        %v699 = vadd.f32 0.0, %v698
        %v700 = vpop.f32.mrb[0].mxu0
        %701 = vmatprep.mubr.f32.mxu0 0.0
        %702 = vmatmul.mubr.f32.gmra.mrb[0].mxu0 %v560
        %v703 = vpop.f32.mrb[0].mxu0
        %v704 = vadd.f32 0.0, %v703
        %v705 = vpop.f32.mrb[0].mxu0
        %706 = vdwg.mxu0
        %v707 = vmax.f32 %v629, 0.0
        %v708 = vmax.f32 %v634, 0.0
        %v709 = vmax.f32 %v639, 0.0
        %v710 = vmax.f32 %v644, 0.0
        %v711 = vmax.f32 %v649, 0.0
        %v712 = vmax.f32 %v654, 0.0
        %v713 = vmax.f32 %v659, 0.0
        %v714 = vmax.f32 %v664, 0.0
        %v715 = vmax.f32 %v669, 0.0
        %v716 = vmax.f32 %v674, 0.0
        %v717 = vmax.f32 %v679, 0.0
        %v718 = vmax.f32 %v684, 0.0
        %v719 = vmax.f32 %v689, 0.0
        %v720 = vmax.f32 %v694, 0.0
        %v721 = vmax.f32 %v699, 0.0
        %v722 = vmax.f32 %v704, 0.0
        %vm723 = vcmask 261120
        %724 = vst.msk [vmem:[%s262] sm:$0xff] %vm723, %v707
        %725 = vst.msk [vmem:[%s262 + $0x8] sm:$0xff] %vm723, %v708
        %726 = vst.msk [vmem:[%s262 + $0x10] sm:$0xff] %vm723, %v709
        %727 = vst.msk [vmem:[%s262 + $0x18] sm:$0xff] %vm723, %v710
        %728 = vst.msk [vmem:[%s262 + $0x20] sm:$0xff] %vm723, %v711
        %729 = vst.msk [vmem:[%s262 + $0x28] sm:$0xff] %vm723, %v712
        %730 = vst.msk [vmem:[%s262 + $0x30] sm:$0xff] %vm723, %v713
        %731 = vst.msk [vmem:[%s262 + $0x38] sm:$0xff] %vm723, %v714
        %732 = vst.msk [vmem:[%s262 + $0x40] sm:$0xff] %vm723, %v715
        %733 = vst.msk [vmem:[%s262 + $0x48] sm:$0xff] %vm723, %v716
        %734 = vst.msk [vmem:[%s262 + $0x50] sm:$0xff] %vm723, %v717
        %735 = vst.msk [vmem:[%s262 + $0x58] sm:$0xff] %vm723, %v718
        %736 = vst.msk [vmem:[%s262 + $0x60] sm:$0xff] %vm723, %v719
        %737 = vst.msk [vmem:[%s262 + $0x68] sm:$0xff] %vm723, %v720
        %738 = vst.msk [vmem:[%s262 + $0x70] sm:$0xff] %vm723, %v721
        %739 = vst.msk [vmem:[%s262 + $0x78] sm:$0xff] %vm723, %v722
        %v740 = vsel %vm723, %v707, 0.0
        %v741 = vsel %vm723, %v708, 0.0
        %v742 = vadd.f32 %v740, %v741
        %v743 = vsel %vm723, %v709, 0.0
        %v744 = vadd.f32 %v742, %v743
        %v745 = vsel %vm723, %v710, 0.0
        %v746 = vadd.f32 %v744, %v745
        %v747 = vsel %vm723, %v711, 0.0
        %v748 = vadd.f32 %v746, %v747
        %v749 = vsel %vm723, %v712, 0.0
        %v750 = vadd.f32 %v748, %v749
        %v751 = vsel %vm723, %v713, 0.0
        %v752 = vadd.f32 %v750, %v751
        %v753 = vsel %vm723, %v714, 0.0
        %v754 = vadd.f32 %v752, %v753
        %v755 = vsel %vm723, %v715, 0.0
        %v756 = vadd.f32 %v754, %v755
        %v757 = vsel %vm723, %v716, 0.0
        %v758 = vadd.f32 %v756, %v757
        %v759 = vsel %vm723, %v717, 0.0
        %v760 = vadd.f32 %v758, %v759
        %v761 = vsel %vm723, %v718, 0.0
        %v762 = vadd.f32 %v760, %v761
        %v763 = vsel %vm723, %v719, 0.0
        %v764 = vadd.f32 %v762, %v763
        %v765 = vsel %vm723, %v720, 0.0
        %v766 = vadd.f32 %v764, %v765
        %v767 = vsel %vm723, %v721, 0.0
        %v768 = vadd.f32 %v766, %v767
        %v769 = vsel %vm723, %v722, 0.0
        %v770 = vadd.f32 %v768, %v769
        %v771 = vrot.slane %v770, 4
        %v772 = vadd.f32 %v770, %v771
        %v773 = vrot.slane %v772, 2
        %v774 = vadd.f32 %v772, %v773
        %v775 = vrot.slane %v774, 1
        %v776 = vadd.f32 %v774, %v775
        %vm777 = vcmask 253952
        %778 = vst.msk [vmem:[%s268] sm:$0x1] %vm777, %v776
        %v779 = vmul.f32 %v707, %v707
        %v780 = vmul.f32 %v708, %v708
        %v781 = vmul.f32 %v709, %v709
        %v782 = vmul.f32 %v710, %v710
        %v783 = vmul.f32 %v711, %v711
        %v784 = vmul.f32 %v712, %v712
        %v785 = vmul.f32 %v713, %v713
        %v786 = vmul.f32 %v714, %v714
        %v787 = vmul.f32 %v715, %v715
        %v788 = vmul.f32 %v716, %v716
        %v789 = vmul.f32 %v717, %v717
        %v790 = vmul.f32 %v718, %v718
        %v791 = vmul.f32 %v719, %v719
        %v792 = vmul.f32 %v720, %v720
        %v793 = vmul.f32 %v721, %v721
        %v794 = vmul.f32 %v722, %v722
        %v795 = vsel %vm723, %v779, 0.0
        %v796 = vsel %vm723, %v780, 0.0
        %v797 = vadd.f32 %v795, %v796
        %v798 = vsel %vm723, %v781, 0.0
        %v799 = vadd.f32 %v797, %v798
        %v800 = vsel %vm723, %v782, 0.0
        %v801 = vadd.f32 %v799, %v800
        %v802 = vsel %vm723, %v783, 0.0
        %v803 = vadd.f32 %v801, %v802
        %v804 = vsel %vm723, %v784, 0.0
        %v805 = vadd.f32 %v803, %v804
        %v806 = vsel %vm723, %v785, 0.0
        %v807 = vadd.f32 %v805, %v806
        %v808 = vsel %vm723, %v786, 0.0
        %v809 = vadd.f32 %v807, %v808
        %v810 = vsel %vm723, %v787, 0.0
        %v811 = vadd.f32 %v809, %v810
        %v812 = vsel %vm723, %v788, 0.0
        %v813 = vadd.f32 %v811, %v812
        %v814 = vsel %vm723, %v789, 0.0
        %v815 = vadd.f32 %v813, %v814
        %v816 = vsel %vm723, %v790, 0.0
        %v817 = vadd.f32 %v815, %v816
        %v818 = vsel %vm723, %v791, 0.0
        %v819 = vadd.f32 %v817, %v818
        %v820 = vsel %vm723, %v792, 0.0
        %v821 = vadd.f32 %v819, %v820
        %v822 = vsel %vm723, %v793, 0.0
        %v823 = vadd.f32 %v821, %v822
        %v824 = vsel %vm723, %v794, 0.0
        %v825 = vadd.f32 %v823, %v824
        %v826 = vrot.slane %v825, 4
        %v827 = vadd.f32 %v825, %v826
        %v828 = vrot.slane %v827, 2
        %v829 = vadd.f32 %v827, %v828
        %v830 = vrot.slane %v829, 1
        %v831 = vadd.f32 %v829, %v830
        %832 = vst.msk [vmem:[%s274] sm:$0x1] %vm777, %v831
        %s833 = sand.u32 %s120, 1
        %s834 = scalar_lea.sflag [#allocation3], %s833
        %s835 = sand.u32 %s120, 1
        %s836 = smul.addr %s835, 128
        %s837 = scalar_lea.vmem [#allocation2], %s836
        %s838 = sand.u32 %s23, 1
        %s839 = scalar_lea.sflag [#allocation5], %s838
        %s840 = sand.u32 %s148, 1
        %s841 = scalar_lea.vmem [#allocation4], %s840
        %s842 = sand.u32 %s23, 1
        %s843 = scalar_lea.sflag [#allocation5], %s842
        %s844 = sand.u32 %s176, 1
        %s845 = scalar_lea.vmem [#allocation6], %s844
        // Predicated region
        $region33: #{tpu_custom_call.1} parent=31 // pred_check
          %p846 = pneg %p130
        $region34: #{tpu_custom_call.1} parent=31 // pred_check_branch
          %848 = sbr.rel (%p846) target = $region36
        $region35: #{tpu_custom_call.1} parent=31 // pred_region
          %s849 = smul.u32 8, %s28
          %s851 = ssub.s32 2048, 2048
          %852 = vsyncadd %s834, %s851
          %s853 = smul.addr %s849, 2
          %s854 = smul.addr %s27, 32
          %s855 = sadd.s32 %s853, %s854
          %s856 = smul.addr %s855, 128
          %s857 = scalar_lea.hbm %s3, %s856
          %s858 = sshll.u32 %s837, 4
          %s859 = int_to_ptr.vmem [resolvable:$true] %s858
          %864 = dma.vmem_to_hbm [thread:$0]  %s859, 2048, %s857, %s834, 128, 128, 8
        $region36: #{tpu_custom_call.1} parent=31 // pred_fallthru
          _
        // Predicated region
        $region37: #{tpu_custom_call.1} parent=31 // pred_check
          %p865 = pneg %p158
        $region38: #{tpu_custom_call.1} parent=31 // pred_check_branch
          %867 = sbr.rel (%p865) target = $region40
        $region39: #{tpu_custom_call.1} parent=31 // pred_region
          %s869 = ssub.s32 16, 16
          %870 = vsyncadd %s839, %s869
          %s871 = smul.addr %s27, 2
          %s872 = sadd.s32 %s28, %s871
          %s873 = smul.addr %s872, 16
          %s874 = scalar_lea.hbm %s4, %s873
          %s876 = sshll.u32 %s841, 4
          %s877 = int_to_ptr.vmem [resolvable:$true] %s876
          %879 = dma.vmem_to_hbm [thread:$0]  %s877, 16, %s874, %s839
        $region40: #{tpu_custom_call.1} parent=31 // pred_fallthru
          _
        // Predicated region
        $region41: #{tpu_custom_call.1} parent=31 // pred_check
          %p880 = pneg %p186
        $region42: #{tpu_custom_call.1} parent=31 // pred_check_branch
          %882 = sbr.rel (%p880) target = $region44
        $region43: #{tpu_custom_call.1} parent=31 // pred_region
          %s884 = ssub.s32 16, 16
          %885 = vsyncadd %s843, %s884
          %s886 = smul.addr %s27, 2
          %s887 = sadd.s32 %s28, %s886
          %s888 = smul.addr %s887, 16
          %s889 = scalar_lea.hbm %s5, %s888
          %s891 = sshll.u32 %s845, 4
          %s892 = int_to_ptr.vmem [resolvable:$true] %s891
          %894 = dma.vmem_to_hbm [thread:$0]  %s892, 16, %s889, %s843
        $region44: #{tpu_custom_call.1} parent=31 // pred_fallthru
          _
      $region32: #{tpu_custom_call.1} parent=5 // pred_fallthru
        _
      %p895 = scmp.le.s32.totalorder 2, %s18
      // Predicated region
      $region45: #{tpu_custom_call.1} parent=5 // pred_check
        %p896 = pneg %p895
      $region46: #{tpu_custom_call.1} parent=5 // pred_check_branch
        %898 = sbr.rel (%p896) target = $region48
      $region47: #{tpu_custom_call.1} parent=5 // pred_region
        %s899 = ssub.s32 %s18, 2
        // Predicated region
        $region49: #{tpu_custom_call.1} parent=47 // pred_check
          %p900 = pneg %p136
        $region50: #{tpu_custom_call.1} parent=47 // pred_check_branch
          %902 = sbr.rel (%p900) target = $region52
        $region51: #{tpu_custom_call.1} parent=47 // pred_region
          %s903 = sand.u32 %s121, 1
          %s904 = scalar_lea.sflag [#allocation3], %s903
          %s905 = sand.u32 %s121, 1
          %s906 = smul.addr %s905, 128
          %s907 = scalar_lea.vmem [#allocation2], %s906
          %908 = dma.done %s904, 2048
        $region52: #{tpu_custom_call.1} parent=47 // pred_fallthru
          _
        // Predicated region
        $region53: #{tpu_custom_call.1} parent=47 // pred_check
          %p909 = pneg %p164
        $region54: #{tpu_custom_call.1} parent=47 // pred_check_branch
          %911 = sbr.rel (%p909) target = $region56
        $region55: #{tpu_custom_call.1} parent=47 // pred_region
          %s912 = sand.u32 %s24, 1
          %s913 = scalar_lea.sflag [#allocation5], %s912
          %s914 = sand.u32 %s149, 1
          %s915 = scalar_lea.vmem [#allocation4], %s914
          %916 = dma.done %s913, 16
        $region56: #{tpu_custom_call.1} parent=47 // pred_fallthru
          _
        // Predicated region
        $region57: #{tpu_custom_call.1} parent=47 // pred_check
          %p917 = pneg %p192
        $region58: #{tpu_custom_call.1} parent=47 // pred_check_branch
          %919 = sbr.rel (%p917) target = $region60
        $region59: #{tpu_custom_call.1} parent=47 // pred_region
          %s920 = sand.u32 %s24, 1
          %s921 = scalar_lea.sflag [#allocation5], %s920
          %s922 = sand.u32 %s177, 1
          %s923 = scalar_lea.vmem [#allocation6], %s922
          %924 = dma.done %s921, 16
        $region60: #{tpu_custom_call.1} parent=47 // pred_fallthru
          _
      $region48: #{tpu_custom_call.1} parent=5 // pred_fallthru
        _
    $region6: #{tpu_custom_call.1} parent=1 // loop_footer
      %s22 = sadd.s32 1, %s18
    $region7: #{tpu_custom_call.1} parent=1 // loop_footer_branch
      %17 = sbr.rel target = $region3
    $region8: #{tpu_custom_call.1} parent=1 // loop_exit
      _
    %925 = vsyncpa [#allocation3], 1
    %s926 = scalar_lea.sflag [#allocation3], 1
    %927 = vsyncpa %s926, 1
    %928 = vsyncpa [#allocation5], 1
    %s929 = scalar_lea.sflag [#allocation5], 1
    %930 = vsyncpa %s929, 1

</llo_original>
